<compile_context>
chip_gen: v6e
topology: v6e:2x2x1
jax: 0.10.0
libtpu: 0.0.40
codegen_flags: <defaults>
</compile_context>

<pallas_src>
import math

import jax
import jax.numpy as jnp
from jax.experimental import pallas as pl
from jax.experimental.pallas import tpu as pltpu


# --------------------------------------------------------------------------- #
# Kernels
# --------------------------------------------------------------------------- #
def _residual_linear_kernel(x_ref, w_ref, b_ref, o_ref):
    """Single-K-step variant (tk == tn == H): no accumulator scratch needed."""
    x = x_ref[...]                                        # (tm, H) input dtype
    y = jnp.dot(x.astype(w_ref.dtype), w_ref[...],
                preferred_element_type=jnp.float32)       # bf16 MXU, f32 acc
    y = y + b_ref[...].astype(jnp.float32) + x.astype(jnp.float32)
    o_ref[...] = y.astype(o_ref.dtype)


def _residual_linear_kernel_ktiled(x_ref, w_ref, b_ref, o_ref, acc_ref):
    """General variant: grid = (M, N, K) tiles, f32 accumulator across K."""
    j = pl.program_id(1)                                  # output-column tile
    k = pl.program_id(2)                                  # contraction tile

    @pl.when(k == 0)
    def _init():
        acc_ref[...] = jnp.zeros_like(acc_ref)

    acc_ref[...] += jnp.dot(x_ref[...].astype(w_ref.dtype), w_ref[...],
                            preferred_element_type=jnp.float32)

    # Residual add: because tn == tk, the x block at k == j covers exactly the
    # output tile's columns -- fold it into the accumulator on that step
    # (avoids passing x a second time / duplicate HBM reads).
    @pl.when(k == j)
    def _residual():
        acc_ref[...] += x_ref[...].astype(jnp.float32)

    @pl.when(k == pl.num_programs(2) - 1)
    def _finalize():
        o_ref[...] = (acc_ref[...]
                      + b_ref[...].astype(jnp.float32)).astype(o_ref.dtype)


# --------------------------------------------------------------------------- #
# Tile / VMEM sizing helpers
# --------------------------------------------------------------------------- #
def _round_up(x, m):
    return -(-x // m) * m


def _vmem_capacity_bytes():
    """Per-core VMEM capacity; conservative (v7x) fallback if query fails."""
    try:
        cap = getattr(pltpu.get_tpu_info(), "vmem_capacity_bytes", None)
        if cap:
            return int(cap)
    except Exception:
        pass
    return 64 << 20


def _pick_col_tile(H):
    # Lane-axis tiles must be a multiple of 128 (or the full dim).  Prefer
    # 512/384/256 so the contraction fully feeds the 256-wide MXU on v6e/v7x
    # once the kernel is MXU-bound at large H (v5e's 128-wide MXU is always
    # fully fed).  Falls back to the full dim for H not a multiple of 128.
    for t in (512, 384, 256, 128):
        if H >= t and H % t == 0:
            return t
    return H


def _vmem_footprint_bytes(tm, tk, tn, grid_k, x_isz, w_isz, o_isz):
    x_bytes = 2 * tm * tk * x_isz          # double-buffered input row tiles
    o_bytes = 2 * tm * tn * o_isz          # double-buffered output tiles
    w_bytes = 2 * tk * tn * w_isz          # double-buffered weight tile
    b_bytes = 2 * 8 * tn * 4               # bias row (sublane-padded)
    acc_bytes = tm * tn * 4 if grid_k > 1 else 0
    return x_bytes + o_bytes + w_bytes + b_bytes + acc_bytes


def _pick_row_tile(M, tk, tn, grid_k, x_isz, w_isz, o_isz, budget):
    # Biggest row tile (<= 1024) whose buffers fit the VMEM budget.  16-row
    # alignment keeps sub-32-bit output tiles legally laid out as well.
    tm = min(1024, _round_up(M, 16))
    while tm > 16 and _vmem_footprint_bytes(tm, tk, tn, grid_k,
                                            x_isz, w_isz, o_isz) > budget:
        tm = _round_up(max(tm // 2, 16), 16)
    return tm


# --------------------------------------------------------------------------- #
# Wrapper
# --------------------------------------------------------------------------- #
def residual_add_linear(x, w, b, *, compute_dtype=jnp.bfloat16, out_dtype=None,
                        tm=None, col_tile=None):
    """Fused ResidualAdd(Linear): (x @ w + b) + x.

    x: (..., H)     w: (H, H)  (input-major, y = x @ w)     b: (H,)
    Matmul operands are cast to `compute_dtype` (bf16 default, f32 MXU
    accumulation); bias and residual are added in f32.  Pass the weight
    already in `compute_dtype` (or jit this wrapper) to avoid a per-call cast.
    """
    H = x.shape[-1]
    M = math.prod(x.shape[:-1])
    if w.shape != (H, H):
        raise ValueError(f"weight must be ({H}, {H}), got {w.shape}")
    out_dtype = x.dtype if out_dtype is None else out_dtype

    x2d = x.reshape(M, H)
    w_c = w if w.dtype == compute_dtype else w.astype(compute_dtype)
    b2d = jnp.asarray(b, jnp.float32).reshape(1, H)

    # ---- tile selection ----------------------------------------------------
    tn = tk = int(col_tile) if col_tile is not None else _pick_col_tile(H)
    if H % tn != 0 or (tn % 128 != 0 and tn != H):
        raise ValueError(f"col_tile={tn} incompatible with H={H}")
    grid_n = H // tn
    grid_k = H // tk          # == grid_n (square weight, tn == tk), which is
                              # what lets the residual fold in at k == j.

    capacity = _vmem_capacity_bytes()
    x_isz = jnp.dtype(x.dtype).itemsize
    w_isz = jnp.dtype(compute_dtype).itemsize
    o_isz = jnp.dtype(out_dtype).itemsize
    if tm is None:
        tm = _pick_row_tile(M, tk, tn, grid_k, x_isz, w_isz, o_isz,
                            budget=int(capacity * 0.75))
    tm = _round_up(min(int(tm), _round_up(M, 16)), 16)
    grid_m = pl.cdiv(M, tm)   # ragged last block handled by Pallas (no pad)

    footprint = _vmem_footprint_bytes(tm, tk, tn, grid_k, x_isz, w_isz, o_isz)
    vmem_limit = int(min(capacity, max(footprint + (8 << 20), 16 << 20)))

    # ---- specs ---------------------------------------------------------- --
    x_spec = pl.BlockSpec((tm, tk), lambda i, j, k: (i, k))
    w_spec = pl.BlockSpec((tk, tn), lambda i, j, k: (k, j))
    b_spec = pl.BlockSpec((1, tn), lambda i, j, k: (0, j))
    o_spec = pl.BlockSpec((tm, tn), lambda i, j, k: (i, j))

    if grid_k == 1:
        kernel, scratch = _residual_linear_kernel, []
    else:
        kernel = _residual_linear_kernel_ktiled
        scratch = [pltpu.VMEM((tm, tn), jnp.float32)]

    out2d = pl.pallas_call(
        kernel,
        out_shape=jax.ShapeDtypeStruct((M, H), out_dtype),
        grid_spec=pltpu.PrefetchScalarGridSpec(
            num_scalar_prefetch=0,
            grid=(grid_m, grid_n, grid_k),      # reduction axis last
            in_specs=[x_spec, w_spec, b_spec],
            out_specs=o_spec,
            scratch_shapes=scratch,
        ),
        compiler_params=pltpu.CompilerParams(
            dimension_semantics=("parallel", "parallel", "arbitrary"),
            vmem_limit_bytes=vmem_limit,
        ),
    )(x2d, w_c, b2d)
    return out2d.reshape(x.shape)


# --------------------------------------------------------------------------- #
# References
# --------------------------------------------------------------------------- #
def residual_add_linear_ref(x, w, b, compute_dtype=jnp.bfloat16):
    # Matches the kernel's numerics: compute_dtype matmul operands, f32
    # accumulation, f32 bias + residual.
    y = jnp.einsum("...h,hk->...k", x.astype(compute_dtype),
                   w.astype(compute_dtype), preferred_element_type=jnp.float32)
    return (y + b.astype(jnp.float32) + x.astype(jnp.float32)).astype(x.dtype)


def residual_add_linear_ref_f32(x, w, b):
    return jnp.einsum("...h,hk->...k", x, w) + b + x


# --------------------------------------------------------------------------- #
# Self-test
# --------------------------------------------------------------------------- #
if __name__ == "__main__":
    key = jax.random.PRNGKey(0)
    kx1, kx2, kx3, kw1, kb1, kw3, kb3 = jax.random.split(key, 7)

    fused = jax.jit(residual_add_linear,
                    static_argnames=("compute_dtype", "out_dtype", "tm", "col_tile"))

    # --- 1) small shape: grid (1,1,1), fused single-step kernel -------------
    H = 128
    w = jax.random.normal(kw1, (H, H), jnp.float32) / jnp.sqrt(H)
    b = jax.random.normal(kb1, (H,), jnp.float32) * 0.01
    w_bf16 = w.astype(jnp.bfloat16)          # cast hoisted: stored once in bf16

    x1 = jax.random.normal(kx1, (2, 8, H), jnp.float32)
    out1 = jax.block_until_ready(fused(x1, w_bf16, b))
    assert out1.shape == x1.shape and out1.dtype == x1.dtype
    assert jnp.allclose(out1, residual_add_linear_ref(x1, w, b),
                        atol=1e-3, rtol=1e-3), "mismatch vs bf16 reference"
    assert jnp.allclose(out1, residual_add_linear_ref_f32(x1, w, b),
                        atol=5e-2, rtol=5e-2), "mismatch vs f32 reference"

    # --- 2) ragged M: 400 rows, tm=128 -> 4 row tiles, last one partial ------
    x2 = jax.random.normal(kx2, (2, 200, H), jnp.float32)
    out2 = jax.block_until_ready(fused(x2, w_bf16, b, tm=128))
    assert out2.shape == x2.shape
    assert jnp.allclose(out2, residual_add_linear_ref(x2, w, b),
                        atol=1e-3, rtol=1e-3), "mismatch (ragged M path)"

    # --- 3) N/K-tiled path: H=256, col_tile=128 -> grid_n = grid_k = 2 -------
    H3 = 256
    w3 = (jax.random.normal(kw3, (H3, H3), jnp.float32) / jnp.sqrt(H3)
          ).astype(jnp.bfloat16)
    b3 = jax.random.normal(kb3, (H3,), jnp.float32) * 0.01
    x3 = jax.random.normal(kx3, (2, 8, H3), jnp.float32)
    out3 = jax.block_until_ready(fused(x3, w3, b3, col_tile=128))
    assert out3.shape == x3.shape
    assert jnp.allclose(out3, residual_add_linear_ref(x3, w3.astype(jnp.float32), b3),
                        atol=1e-3, rtol=1e-3), "mismatch (K-tiled accumulator path)"

    # --- 4) opt-in bf16 output (halves write traffic when tolerated) ---------
    out4 = jax.block_until_ready(fused(x1, w_bf16, b, out_dtype=jnp.bfloat16))
    assert out4.dtype == jnp.bfloat16
    assert jnp.allclose(out4.astype(jnp.float32), residual_add_linear_ref(x1, w, b),
                        atol=5e-2, rtol=5e-2), "mismatch (bf16 output)"

    print("KERNEL_OK")
</pallas_src>

<mosaic_0001>
module attributes {stable_mosaic.version = 11 : i64} {
  func.func @_residual_linear_kernel(%arg0: i32, %arg1: i32, %arg2: i32, %arg3: memref<16x128xf32, #tpu.memory_space<vmem>>, %arg4: memref<128x128xbf16, #tpu.memory_space<vmem>>, %arg5: memref<1x128xf32, #tpu.memory_space<vmem>>, %arg6: memref<16x128xf32, #tpu.memory_space<vmem>>) attributes {dimension_semantics = [#tpu.dimension_semantics<parallel>, #tpu.dimension_semantics<parallel>, #tpu.dimension_semantics<arbitrary>], iteration_bounds = array<i64: 1, 1, 1>, scalar_prefetch = 0 : i64, scratch_operands = 0 : i64, tpu.core_type = #tpu.core_type<tc>, window_params = [{transform_indices = @transform_0, window_bounds = array<i64: 16, 128>}, {transform_indices = @transform_1, window_bounds = array<i64: 128, 128>}, {transform_indices = @transform_2, window_bounds = array<i64: 1, 128>}, {transform_indices = @transform_3, window_bounds = array<i64: 16, 128>}]} {
    %c0 = arith.constant 0 : index
    %c0_0 = arith.constant 0 : index
    %0 = vector.load %arg3[%c0, %c0_0] : memref<16x128xf32, #tpu.memory_space<vmem>>, vector<16x128xf32>
    %1 = arith.truncf %0 : vector<16x128xf32> to vector<16x128xbf16>
    %c0_1 = arith.constant 0 : index
    %c0_2 = arith.constant 0 : index
    %2 = vector.load %arg4[%c0_1, %c0_2] : memref<128x128xbf16, #tpu.memory_space<vmem>>, vector<128x128xbf16>
    %cst = arith.constant dense<0.000000e+00> : vector<16x128xf32>
    %3 = tpu.matmul %1, %2, %cst {dimension_numbers = #tpu.dot_dimension_numbers<[1], [0], [0], [1], [0, 0, 1, 1], [], []>} : vector<16x128xbf16>, vector<128x128xbf16>, vector<16x128xf32> -> vector<16x128xf32>
    %c0_3 = arith.constant 0 : index
    %c0_4 = arith.constant 0 : index
    %4 = vector.load %arg5[%c0_3, %c0_4] : memref<1x128xf32, #tpu.memory_space<vmem>>, vector<1x128xf32>
    %5 = vector.broadcast %4 : vector<1x128xf32> to vector<16x128xf32>
    %6 = arith.addf %3, %5 : vector<16x128xf32>
    %7 = arith.addf %6, %0 : vector<16x128xf32>
    %c0_5 = arith.constant 0 : index
    %c0_6 = arith.constant 0 : index
    %8 = vector.load %arg6[%c0_5, %c0_6] : memref<16x128xf32, #tpu.memory_space<vmem>>, vector<16x128xf32>
    tpu.vector_store %arg6[%c0_5, %c0_6], %7 {strides = array<i32>} : memref<16x128xf32, #tpu.memory_space<vmem>>, vector<16x128xf32>,
    return
  }
  func.func @transform_0(%arg0: i32, %arg1: i32, %arg2: i32) -> (i32, i32) {
    %c0_i32 = arith.constant 0 : i32
    return %arg0, %arg2 : i32, i32
  }
  func.func @transform_1(%arg0: i32, %arg1: i32, %arg2: i32) -> (i32, i32) {
    %c0_i32 = arith.constant 0 : i32
    return %arg2, %arg1 : i32, i32
  }
  func.func @transform_2(%arg0: i32, %arg1: i32, %arg2: i32) -> (i32, i32) {
    %c0_i32 = arith.constant 0 : i32
    %c0_i32_0 = arith.constant 0 : i32
    return %c0_i32, %arg1 : i32, i32
  }
  func.func @transform_3(%arg0: i32, %arg1: i32, %arg2: i32) -> (i32, i32) {
    %c0_i32 = arith.constant 0 : i32
    return %arg0, %arg1 : i32, i32
  }
}

</mosaic_0001>

<llo_original>
// kernel: residual_add_linear.1
$region0: #{residual_add_linear.1}
  #allocation0 [shape = 'u32[]', space=smem, size = 0x4, offset = 0x4, fixed_abs, tag = 'smem constant byte address 0x4 - core index']
  #allocation1 [shape = 'u32[144,128]{1,0:T(1,128)}', space=vmem, size = 0x12000, scoped, tag = 'internal scratch']
  %s0 = inlined_call_operand.hbm [shape: f32[16,128], index: 0, kind: input, shape index: {}]
  %s1 = inlined_call_operand.hbm [shape: bf16[128,128], index: 1, kind: input, shape index: {}]
  %s2 = inlined_call_operand.vmem [shape: f32[1,128], index: 2, kind: input, shape index: {}]
  %s3 = inlined_call_operand.hbm [shape: f32[16,128], index: 3, kind: output, shape index: {}]
  %s4 = sld [smem:[#allocation0]]
  $region30: #{residual_add_linear.1} parent=0
    _
  %s6 = ssub.s32 1, %s4
  %s7 = scalar_select 0, %s6, %s4
  $region1: #{residual_add_linear.1} parent=0
    #allocation2 [shape = 'u8[8192]{0}', space=vmem, size = 0x2000, scoped, tag = 'input window, operand 0, single buffered']
    #allocation3 [shape = 's32[1]{0}', space=sflag, size = 0x4, scoped, tag = 'scoped memory for residual_add_linear.1']
    #allocation4 [shape = 's32[1]{0}', space=sflag, size = 0x4, scoped, tag = 'scoped memory for residual_add_linear.1']
    #allocation5 [shape = 'u8[32768]{0}', space=vmem, size = 0x8000, scoped, tag = 'input window, operand 1, single buffered']
    #allocation6 [shape = 's32[1]{0}', space=sflag, size = 0x4, scoped, tag = 'scoped memory for residual_add_linear.1']
    #allocation7 [shape = 'u8[8192]{0}', space=vmem, size = 0x2000, scoped, tag = 'output window, operand 0, single buffered']
    %8 = vsyncpa [#allocation3], 0
    %9 = vsyncpa [#allocation6], 0
    %10 = vsyncpa [#allocation4], 0
    // Predicated region
    $region2: #{residual_add_linear.1} parent=1 // pred_check
      _
    $region3: #{residual_add_linear.1} parent=1 // pred_check_branch
      %12 = sbr.rel (0) target = $region5
    $region4: #{residual_add_linear.1} parent=1 // pred_region
      %s14 = ssub.s32 256, 256
      %15 = vsyncadd [#allocation3], %s14
      %s16 = sshll.u32 [#allocation2], 4
      %s17 = int_to_ptr.vmem [resolvable:$true] %s16
      %22 = dma.hbm_to_vmem [thread:$0]  %s0, 256, %s17, [#allocation3], 128, 128, 8
    $region5: #{residual_add_linear.1} parent=1 // pred_fallthru
      _
    // Predicated region
    $region6: #{residual_add_linear.1} parent=1 // pred_check
      _
    $region7: #{residual_add_linear.1} parent=1 // pred_check_branch
      %24 = sbr.rel (0) target = $region9
    $region8: #{residual_add_linear.1} parent=1 // pred_region
      %s26 = ssub.s32 1024, 1024
      %27 = vsyncadd [#allocation6], %s26
      %s28 = sshll.u32 [#allocation5], 4
      %s29 = int_to_ptr.vmem [resolvable:$true] %s28
      %34 = dma.hbm_to_vmem [thread:$0]  %s1, 1024, %s29, [#allocation6], 64, 64, 4
    $region9: #{residual_add_linear.1} parent=1 // pred_fallthru
      _
    // Predicated region
    $region10: #{residual_add_linear.1} parent=1 // pred_check
      _
    $region11: #{residual_add_linear.1} parent=1 // pred_check_branch
      %36 = sbr.rel (0) target = $region13
    $region12: #{residual_add_linear.1} parent=1 // pred_region
      _
    $region13: #{residual_add_linear.1} parent=1 // pred_fallthru
      _
    // Predicated region
    $region14: #{residual_add_linear.1} parent=1 // pred_check
      _
    $region15: #{residual_add_linear.1} parent=1 // pred_check_branch
      %38 = sbr.rel (0) target = $region17
    $region16: #{residual_add_linear.1} parent=1 // pred_region
      %39 = dma.done [#allocation3], 256
    $region17: #{residual_add_linear.1} parent=1 // pred_fallthru
      _
    // Predicated region
    $region18: #{residual_add_linear.1} parent=1 // pred_check
      _
    $region19: #{residual_add_linear.1} parent=1 // pred_check_branch
      %41 = sbr.rel (0) target = $region21
    $region20: #{residual_add_linear.1} parent=1 // pred_region
      %42 = dma.done [#allocation6], 1024
    $region21: #{residual_add_linear.1} parent=1 // pred_fallthru
      _
    %v44 = vld [vmem:[#allocation2] sm:$0xff]
    %v45 = vld [vmem:[#allocation2 + $0x8] sm:$0xff]
    %v46 = vpack.c.bf16 %v45, %v44
    %v47 = vld [vmem:[#allocation5] sm:$0xf]
    %v48 = vld [vmem:[#allocation5 + $0x4] sm:$0xf]
    %v49 = vld [vmem:[#allocation5 + $0x8] sm:$0xf]
    %v50 = vld [vmem:[#allocation5 + $0xc] sm:$0xf]
    %v51 = vld [vmem:[#allocation5 + $0x10] sm:$0xf]
    %v52 = vld [vmem:[#allocation5 + $0x14] sm:$0xf]
    %v53 = vld [vmem:[#allocation5 + $0x18] sm:$0xf]
    %v54 = vld [vmem:[#allocation5 + $0x1c] sm:$0xf]
    %v55 = vld [vmem:[#allocation5 + $0x20] sm:$0xf]
    %v56 = vld [vmem:[#allocation5 + $0x24] sm:$0xf]
    %v57 = vld [vmem:[#allocation5 + $0x28] sm:$0xf]
    %v58 = vld [vmem:[#allocation5 + $0x2c] sm:$0xf]
    %v59 = vld [vmem:[#allocation5 + $0x30] sm:$0xf]
    %v60 = vld [vmem:[#allocation5 + $0x34] sm:$0xf]
    %v61 = vld [vmem:[#allocation5 + $0x38] sm:$0xf]
    %v62 = vld [vmem:[#allocation5 + $0x3c] sm:$0xf]
    %v63 = vld [vmem:[%s2] sm:$0x1]
    %v65 = vlaneseq
    %v66 = vshrl.u32 %v65, 7
    %v67 = vsub.s32 0, %v66
    %v68 = vrot.slane %v63, %v67
    %v86 = vunpack.c.l.b16 %v47
    %v87 = vunpack.c.l.b16 %v48
    %v88 = vunpack.c.l.b16 %v49
    %v89 = vunpack.c.l.b16 %v50
    %v90 = vunpack.c.l.b16 %v51
    %v91 = vunpack.c.l.b16 %v52
    %v92 = vunpack.c.l.b16 %v53
    %v93 = vunpack.c.l.b16 %v54
    %v94 = vunpack.c.l.b16 %v55
    %v95 = vunpack.c.l.b16 %v56
    %v96 = vunpack.c.l.b16 %v57
    %v97 = vunpack.c.l.b16 %v58
    %v98 = vunpack.c.l.b16 %v59
    %v99 = vunpack.c.l.b16 %v60
    %v100 = vunpack.c.l.b16 %v61
    %v101 = vunpack.c.l.b16 %v62
    %v102 = vpack.c.b16 %v87, %v86
    %v103 = vpack.c.b16 %v89, %v88
    %v104 = vpack.c.b16 %v91, %v90
    %v105 = vpack.c.b16 %v93, %v92
    %v106 = vpack.c.b16 %v95, %v94
    %v107 = vpack.c.b16 %v97, %v96
    %v108 = vpack.c.b16 %v99, %v98
    %v109 = vpack.c.b16 %v101, %v100
    %118 = vmatprep.subr.bf16.mxu0 0
    %119 = vmatpush1.bf16.msra.mxu0 %v109
    %120 = vmatprep.subr.bf16.mxu0 0
    %121 = vmatpush1.bf16.msra.mxu0 %v108
    %122 = vmatprep.subr.bf16.mxu0 0
    %123 = vmatpush1.bf16.msra.mxu0 %v107
    %124 = vmatprep.subr.bf16.mxu0 0
    %125 = vmatpush1.bf16.msra.mxu0 %v106
    %126 = vmatprep.subr.bf16.mxu0 0
    %127 = vmatpush1.bf16.msra.mxu0 %v105
    %128 = vmatprep.subr.bf16.mxu0 0
    %129 = vmatpush1.bf16.msra.mxu0 %v104
    %130 = vmatprep.subr.bf16.mxu0 0
    %131 = vmatpush1.bf16.msra.mxu0 %v103
    %132 = vmatprep.subr.bf16.mxu0 0
    %133 = vmatpush1.bf16.msra.mxu0 %v102
    %134 = vmatprep.subr.bf16.mxu0 0
    %135 = vmatpush2.bf16.msra.mxu0 0
    %136 = vmatprep.subr.bf16.mxu0 0
    %137 = vmatpush2.bf16.msra.mxu0 0
    %138 = vmatprep.subr.bf16.mxu0 0
    %139 = vmatpush2.bf16.msra.mxu0 0
    %140 = vmatprep.subr.bf16.mxu0 0
    %141 = vmatpush2.bf16.msra.mxu0 0
    %142 = vmatprep.subr.bf16.mxu0 0
    %143 = vmatpush2.bf16.msra.mxu0 0
    %144 = vmatprep.subr.bf16.mxu0 0
    %145 = vmatpush2.bf16.msra.mxu0 0
    %146 = vmatprep.subr.bf16.mxu0 0
    %147 = vmatpush2.bf16.msra.mxu0 0
    %148 = vmatprep.subr.bf16.mxu0 0
    %149 = vmatpush2.bf16.msra.mxu0 0
    %150 = vmatprep.mubr.bf16.mxu0 0
    %151 = vmatmul.mubr.bf16.gmra.mxu0 %v46
    %v152 = vpop.f32.mrf.mxu0
    %v153 = vadd.f32 %v68, %v152
    %v154 = vpop.f32.mrf.mxu0
    %v155 = vpop.f32.mrf.mxu0
    %v156 = vadd.f32 %v68, %v155
    %v157 = vpop.f32.mrf.mxu0
    %158 = vdwg.mxu0
    %v159 = vadd.f32 %v153, %v44
    %v160 = vadd.f32 %v156, %v45
    %161 = vst [vmem:[#allocation7] sm:$0xff] %v159
    %162 = vst [vmem:[#allocation7 + $0x8] sm:$0xff] %v160
    // Predicated region
    $region22: #{residual_add_linear.1} parent=1 // pred_check
      _
    $region23: #{residual_add_linear.1} parent=1 // pred_check_branch
      %164 = sbr.rel (0) target = $region25
    $region24: #{residual_add_linear.1} parent=1 // pred_region
      %s166 = ssub.s32 256, 256
      %167 = vsyncadd [#allocation4], %s166
      %s168 = sshll.u32 [#allocation7], 4
      %s169 = int_to_ptr.vmem [resolvable:$true] %s168
      %174 = dma.vmem_to_hbm [thread:$0]  %s169, 256, %s3, [#allocation4], 128, 128, 8
    $region25: #{residual_add_linear.1} parent=1 // pred_fallthru
      _
    // Predicated region
    $region26: #{residual_add_linear.1} parent=1 // pred_check
      _
    $region27: #{residual_add_linear.1} parent=1 // pred_check_branch
      %176 = sbr.rel (0) target = $region29
    $region28: #{residual_add_linear.1} parent=1 // pred_region
      %177 = dma.done [#allocation4], 256
    $region29: #{residual_add_linear.1} parent=1 // pred_fallthru
      _
    %178 = vsyncpa [#allocation3], 1
    %179 = vsyncpa [#allocation6], 1
    %180 = vsyncpa [#allocation4], 1

</llo_original>
